<compile_context>
chip_gen: v5e
topology: v5e:2x2
jax: 0.10.0
libtpu: 0.0.40
codegen_flags: <defaults>
</compile_context>

<pallas_src>
import jax
import jax.numpy as jnp
from jax.experimental import pallas as pl
from jax.experimental.pallas import tpu as pltpu


def _identity_copy_kernel(x_ref, o_ref):
    # Whole-array VMEM views; the flatten already happened as a zero-cost
    # reshape in the wrapper, so the kernel is just the (aliased) data path.
    o_ref[...] = x_ref[...]


def _packed_2d_shape(total_elems):
    """Pick a fully packed (sublane, lane) shape: last dim % 128 == 0,
    second-to-last % 8 == 0. Returns None if no such factorization exists."""
    for lanes in (1024, 512, 256, 128):
        if total_elems % (8 * lanes) == 0:
            return (total_elems // lanes, lanes)
    return None


def resnet_forward(x):
    """Pallas implementation of ResNet.forward: x.view(x.shape[0], -1)."""
    n = x.shape[0]
    f = 1
    for d in x.shape[1:]:
        f *= d

    total = n * f
    packed = _packed_2d_shape(total)
    kshape = packed if packed is not None else (n, f)

    # Metadata-only row-major flatten / repack (== torch .view semantics).
    x_packed = jnp.reshape(x, kshape)

    out = pl.pallas_call(
        _identity_copy_kernel,
        out_shape=jax.ShapeDtypeStruct(kshape, x.dtype),
        # No grid: a single whole-array block, no per-step grid bookkeeping.
        in_specs=[pl.BlockSpec(memory_space=pltpu.MemorySpace.VMEM)],
        out_specs=pl.BlockSpec(memory_space=pltpu.MemorySpace.VMEM),
        # Output reuses the input HBM buffer: no second slab, half the traffic.
        input_output_aliases={0: 0},
    )(x_packed)

    # Metadata-only reshape back to the flattened (N, C*H*W) view.
    return jnp.reshape(out, (n, f))


# jit the wrapper so the reshapes stay metadata-only and the alias is honored.
resnet_forward = jax.jit(resnet_forward)


if __name__ == "__main__":
    key = jax.random.PRNGKey(0)
    # ResNet.__init__ defines no parameters; forward only reshapes its input.
    x = jax.random.normal(key, (2, 4, 16, 16), dtype=jnp.float32)  # NCHW

    # Reference (== torch x.view(x.shape[0], -1)), computed up front.
    ref = jnp.reshape(x, (x.shape[0], -1))

    y = resnet_forward(x)
    y = jax.block_until_ready(y)

    assert y.shape == (2, 4 * 16 * 16), y.shape
    assert y.dtype == x.dtype
    assert bool(jnp.array_equal(y, ref))

    print("KERNEL_OK")
</pallas_src>

<mosaic_0001>
module attributes {stable_mosaic.version = 11 : i64} {
  func.func @_identity_copy_kernel(%arg0: memref<8x256xf32, #tpu.memory_space<vmem>>, %arg1: memref<8x256xf32, #tpu.memory_space<vmem>>) attributes {dimension_semantics = [], scalar_prefetch = 0 : i64, scratch_operands = 0 : i64, tpu.core_type = #tpu.core_type<tc>} {
    %c0 = arith.constant 0 : index
    %c0_0 = arith.constant 0 : index
    %0 = vector.load %arg0[%c0, %c0_0] : memref<8x256xf32, #tpu.memory_space<vmem>>, vector<8x256xf32>
    %c0_1 = arith.constant 0 : index
    %c0_2 = arith.constant 0 : index
    %1 = vector.load %arg1[%c0_1, %c0_2] : memref<8x256xf32, #tpu.memory_space<vmem>>, vector<8x256xf32>
    tpu.vector_store %arg1[%c0_1, %c0_2], %0 {strides = array<i32>} : memref<8x256xf32, #tpu.memory_space<vmem>>, vector<8x256xf32>,
    return
  }
}

</mosaic_0001>

<llo_original>
// kernel: resnet_forward.1
$region0: #{resnet_forward.1}
  #allocation0 [shape = 'u32[]', space=smem, size = 0x4, offset = 0x4, fixed_abs, tag = 'smem constant byte address 0x4 - core index']
  #allocation1 [shape = 'u32[72,128]{1,0:T(1,128)}', space=vmem, size = 0x9000, scoped, tag = 'internal scratch']
  %s0 = inlined_call_operand.vmem [shape: f32[8,256], index: 0, kind: input, shape index: {}, may-alias: {0,1}]
  %s1 = inlined_call_operand.vmem [shape: f32[8,256], index: 1, kind: output, shape index: {}, may-alias: {0,1}]
  %s2 = sld [smem:[#allocation0]]
  $region14: #{resnet_forward.1} parent=0
    _
  %s4 = ssub.s32 1, %s2
  %s5 = scalar_select 0, %s4, %s2
  // Predicated region
  $region2: #{resnet_forward.1} parent=0 // pred_check
    _
  $region3: #{resnet_forward.1} parent=0 // pred_check_branch
    %7 = sbr.rel (0) target = $region5
  $region4: #{resnet_forward.1} parent=0 // pred_region
    _
  $region5: #{resnet_forward.1} parent=0 // pred_fallthru
    _
  %v8 = vld [vmem:[%s0] sm:$0xff]
  %v9 = vld [vmem:[%s0 + $0x8] sm:$0xff]
  %10 = vst [vmem:[%s1] sm:$0xff] %v8
  %11 = vst [vmem:[%s1 + $0x8] sm:$0xff] %v9
  // Predicated region
  $region6: #{resnet_forward.1} parent=0 // pred_check
    _
  $region7: #{resnet_forward.1} parent=0 // pred_check_branch
    %13 = sbr.rel (0) target = $region9
  $region8: #{resnet_forward.1} parent=0 // pred_region
    _
  $region9: #{resnet_forward.1} parent=0 // pred_fallthru
    _
  // Predicated region
  $region10: #{resnet_forward.1} parent=0 // pred_check
    _
  $region11: #{resnet_forward.1} parent=0 // pred_check_branch
    %15 = sbr.rel (0) target = $region13
  $region12: #{resnet_forward.1} parent=0 // pred_region
    _
  $region13: #{resnet_forward.1} parent=0 // pred_fallthru
    _

</llo_original>
